<compile_context>
chip_gen: v7x
topology: tpu7x:2x2x1
jax: 0.10.0
libtpu: 0.0.40
codegen_flags: <defaults>
</compile_context>

<pallas_src>
import jax
import jax.numpy as jnp
import numpy as np
from jax.experimental import pallas as pl
from jax.experimental.pallas import tpu as pltpu


def _identity_kernel(x_ref, o_ref):
    # Bare tile copy: no per-element work rides the store/VALU slots.
    o_ref[...] = x_ref[...]


_TILE_BUDGET_BYTES = 2 * 1024 * 1024   # ~2 MiB tiles hit ~85-86% of HBM BW; 4x = 8 MiB pipelined
_VMEM_LIMIT_FLOOR = 8 * 1024 * 1024
_VMEM_LIMIT_CAP = 32 * 1024 * 1024     # <= default scoped limits on v6e/v7x, physical on v5e
_MAX_LANES = 2048                      # lane-dense last-dim cap (multiple of 128)
_MIN_KERNEL_BYTES = 1 << 20            # below 1 MiB, dispatch overhead dominates: return x


def _sublane_granule(dtype) -> int:
    # f32 -> 8, bf16/f16 -> 16, int8/fp8 -> 32
    itemsize = jnp.dtype(dtype).itemsize
    return max(8, 32 // itemsize)


def _plan_2d(n):
    """Largest multiple-of-128 last dim (<= _MAX_LANES) dividing n, or None."""
    lanes = (min(_MAX_LANES, n) // 128) * 128
    while lanes >= 128:
        if n % lanes == 0:
            return n // lanes, lanes
        lanes -= 128
    return None


def _plan_tiles(rows, cols, dtype):
    itemsize = jnp.dtype(dtype).itemsize
    granule = _sublane_granule(dtype)
    tc = min(cols, _MAX_LANES)
    max_tr = max(1, _TILE_BUDGET_BYTES // (tc * itemsize))
    if max_tr >= rows:
        # Whole array fits one tile.  Split rows so the grid has >= 2
        # 'parallel' blocks when cheap, letting both v7x TensorCores copy.
        if rows >= 2 * granule:
            half = -(-rows // 2)
            tr = min(rows, -(-half // granule) * granule)
        else:
            tr = rows                  # full extent: always a legal block dim
    else:
        tr = max(granule, (max_tr // granule) * granule)
    return tr, tc


def identity_copy_pallas(x, *, force_kernel=False):
    """Materialize a fresh copy of x via a Pallas copy kernel.

    For an identity op this is never the fast path (2x tensor size in HBM
    traffic); it exists to produce a detached copy / exercise the kernel.
    No input/output aliasing: x remains valid after the call.
    """
    if x.size == 0:
        return x
    itemsize = jnp.dtype(x.dtype).itemsize
    if (x.size * itemsize) < _MIN_KERNEL_BYTES and not force_kernel:
        return x  # dispatch + pipeline overhead dominates; identity holds

    plan = _plan_2d(x.size)
    if plan is None:
        # No lane-dense (multiple-of-128) view exists; a kernel here would run
        # on masked vst.msk partial stores (~4.5x slower writeback). Identity
        # semantics are satisfied by returning x.
        return x

    orig_shape = x.shape
    rows, cols = plan
    x2 = x.reshape(rows, cols)          # contiguous row-major reshape: layout no-op
    tr, tc = _plan_tiles(rows, cols, x.dtype)
    grid = (pl.cdiv(rows, tr), pl.cdiv(cols, tc))

    tile_bytes = tr * tc * itemsize     # in + out, double-buffered = 4x tile
    vmem_limit = int(min(_VMEM_LIMIT_CAP,
                         max(_VMEM_LIMIT_FLOOR, 4 * tile_bytes + (2 << 20))))

    out = pl.pallas_call(
        _identity_kernel,
        out_shape=jax.ShapeDtypeStruct((rows, cols), x.dtype),
        grid=grid,
        in_specs=[pl.BlockSpec((tr, tc), lambda i, j: (i, j))],
        out_specs=pl.BlockSpec((tr, tc), lambda i, j: (i, j)),
        compiler_params=pltpu.CompilerParams(
            dimension_semantics=("parallel", "parallel"),
            vmem_limit_bytes=vmem_limit,
        ),
    )(x2)
    return out.reshape(orig_shape)


def identity_map(x, *args, materialize=False, **kwargs):
    """Pallas equivalent of IdentityMap.forward: returns x unchanged.

    Default path is zero HBM traffic (`return x`).  Set materialize=True to
    obtain a detached copy through the Pallas kernel.
    """
    del args, kwargs  # ignored, matching the PyTorch IdentityMap contract
    if not materialize:
        return x
    return identity_copy_pallas(x)


# Mirrors the module's `config` property (static metadata, no kernel needed).
IDENTITY_MAP_CONFIG = {"mm_projector_type": "identity"}


if __name__ == "__main__":
    key = jax.random.PRNGKey(0)

    # Projector-shaped small input: (batch=2, seq=8, hidden=32), f32.
    x = jax.random.normal(key, (2, 8, 32), dtype=jnp.float32)
    x_np = np.asarray(x)

    # 1) Production path: zero HBM traffic, same array object returned.
    y_fast = identity_map(x)
    assert y_fast is x

    # 2) Explicitly forced Pallas copy kernel on the small input: fresh buffer,
    #    no aliasing, input stays valid afterwards.
    y = jax.block_until_ready(identity_copy_pallas(x, force_kernel=True))
    assert y.shape == x_np.shape and y.dtype == jnp.float32
    assert np.array_equal(np.asarray(y), x_np)
    assert np.array_equal(np.asarray(x), x_np)  # x untouched (no donation/alias)

    # 3) ViT-token-shaped bf16 case crossing the 1 MiB threshold naturally:
    #    lane-dense (577, 2048) view, 512x2048 tiles, grid (2, 1) so both v7x
    #    TensorCores get a 'parallel' block; ~10 MiB VMEM footprint.
    xb = jax.random.normal(jax.random.PRNGKey(1), (2, 577, 1024)).astype(jnp.bfloat16)
    xb_np = np.asarray(xb)
    yb = jax.block_until_ready(identity_map(xb, materialize=True))
    assert yb.shape == xb_np.shape and yb.dtype == jnp.bfloat16
    assert np.array_equal(np.asarray(yb), xb_np)

    print("KERNEL_OK")
</pallas_src>

<mosaic_0001>
module attributes {stable_mosaic.version = 11 : i64} {
  func.func @_identity_kernel(%arg0: i32, %arg1: i32, %arg2: memref<1x512xf32, #tpu.memory_space<vmem>>, %arg3: memref<1x512xf32, #tpu.memory_space<vmem>>) attributes {dimension_semantics = [#tpu.dimension_semantics<parallel>, #tpu.dimension_semantics<parallel>], iteration_bounds = array<i64: 1, 1>, scalar_prefetch = 0 : i64, scratch_operands = 0 : i64, tpu.core_type = #tpu.core_type<tc>, window_params = [{transform_indices = @transform_0, window_bounds = array<i64: 1, 512>}, {transform_indices = @transform_1, window_bounds = array<i64: 1, 512>}]} {
    %c0 = arith.constant 0 : index
    %c0_0 = arith.constant 0 : index
    %0 = vector.load %arg2[%c0, %c0_0] : memref<1x512xf32, #tpu.memory_space<vmem>>, vector<1x512xf32>
    %c0_1 = arith.constant 0 : index
    %c0_2 = arith.constant 0 : index
    %1 = vector.load %arg3[%c0_1, %c0_2] : memref<1x512xf32, #tpu.memory_space<vmem>>, vector<1x512xf32>
    tpu.vector_store %arg3[%c0_1, %c0_2], %0 {strides = array<i32>} : memref<1x512xf32, #tpu.memory_space<vmem>>, vector<1x512xf32>,
    return
  }
  func.func @transform_0(%arg0: i32, %arg1: i32) -> (i32, i32) {
    %c0_i32 = arith.constant 0 : i32
    return %arg0, %arg1 : i32, i32
  }
  func.func @transform_1(%arg0: i32, %arg1: i32) -> (i32, i32) {
    %c0_i32 = arith.constant 0 : i32
    return %arg0, %arg1 : i32, i32
  }
}

</mosaic_0001>

<llo_original>
// kernel: tpu_custom_call.1
$region0: #{tpu_custom_call.1}
  #allocation0 [shape = 'u32[]', space=smem, size = 0x4, offset = 0x4, fixed_abs, tag = 'smem constant byte address 0x4 - core index']
  #allocation1 [shape = 'u32[144,128]{1,0:T(1,128)}', space=vmem, size = 0x12000, scoped, tag = 'internal scratch']
  %s0 = inlined_call_operand.hbm [shape: f32[1,512], index: 0, kind: input, shape index: {}]
  %s1 = inlined_call_operand.hbm [shape: f32[1,512], index: 1, kind: output, shape index: {}]
  %s2 = sld [smem:[#allocation0]]
  $region18: #{tpu_custom_call.1} parent=0
    _
  %s4 = ssub.s32 1, %s2
  %s5 = scalar_select 0, %s4, %s2
  $region1: #{tpu_custom_call.1} parent=0
    #allocation2 [shape = 'u8[2048]{0}', space=vmem, size = 0x800, scoped, tag = 'input window, operand 0, single buffered']
    #allocation3 [shape = 's32[1]{0}', space=sflag, size = 0x4, scoped, tag = 'scoped memory for tpu_custom_call.1']
    #allocation4 [shape = 's32[1]{0}', space=sflag, size = 0x4, scoped, tag = 'scoped memory for tpu_custom_call.1']
    #allocation5 [shape = 'u8[2048]{0}', space=vmem, size = 0x800, scoped, tag = 'output window, operand 0, single buffered']
    %6 = vsyncpa [#allocation3], 0
    %7 = vsyncpa [#allocation4], 0
    // Predicated region
    $region2: #{tpu_custom_call.1} parent=1 // pred_check
      _
    $region3: #{tpu_custom_call.1} parent=1 // pred_check_branch
      %9 = sbr.rel (0) target = $region5
    $region4: #{tpu_custom_call.1} parent=1 // pred_region
      %s11 = ssub.s32 64, 64
      %12 = vsyncadd [#allocation3], %s11
      %s14 = sshll.u32 [#allocation2], 4
      %s15 = int_to_ptr.vmem [resolvable:$true] %s14
      %17 = dma.hbm_to_vmem [thread:$0]  %s0, 64, %s15, [#allocation3]
    $region5: #{tpu_custom_call.1} parent=1 // pred_fallthru
      _
    // Predicated region
    $region6: #{tpu_custom_call.1} parent=1 // pred_check
      _
    $region7: #{tpu_custom_call.1} parent=1 // pred_check_branch
      %19 = sbr.rel (0) target = $region9
    $region8: #{tpu_custom_call.1} parent=1 // pred_region
      %20 = dma.done [#allocation3], 64
    $region9: #{tpu_custom_call.1} parent=1 // pred_fallthru
      _
    %v21 = vld [vmem:[#allocation2] sm:$0xf]
    %v22 = vlaneseq
    %vm23 = vcmp.ge.s32.totalorder %v22, 0
    %vm24 = vcmp.lt.s32.totalorder %v22, 512
    %vm25 = vmand %vm23, %vm24
    %26 = vst.msk [vmem:[#allocation5] sm:$0xf] %vm25, %v21
    // Predicated region
    $region10: #{tpu_custom_call.1} parent=1 // pred_check
      _
    $region11: #{tpu_custom_call.1} parent=1 // pred_check_branch
      %28 = sbr.rel (0) target = $region13
    $region12: #{tpu_custom_call.1} parent=1 // pred_region
      %s30 = ssub.s32 64, 64
      %31 = vsyncadd [#allocation4], %s30
      %s33 = sshll.u32 [#allocation5], 4
      %s34 = int_to_ptr.vmem [resolvable:$true] %s33
      %36 = dma.vmem_to_hbm [thread:$0]  %s34, 64, %s1, [#allocation4]
    $region13: #{tpu_custom_call.1} parent=1 // pred_fallthru
      _
    // Predicated region
    $region14: #{tpu_custom_call.1} parent=1 // pred_check
      _
    $region15: #{tpu_custom_call.1} parent=1 // pred_check_branch
      %38 = sbr.rel (0) target = $region17
    $region16: #{tpu_custom_call.1} parent=1 // pred_region
      %39 = dma.done [#allocation4], 64
    $region17: #{tpu_custom_call.1} parent=1 // pred_fallthru
      _
    %40 = vsyncpa [#allocation3], 1
    %41 = vsyncpa [#allocation4], 1

</llo_original>
